<compile_context>
chip_gen: v5e
topology: v5e:2x2
jax: 0.10.0
libtpu: 0.0.40
codegen_flags: <defaults>
</compile_context>

<pallas_src>
import functools
import math

import jax
import jax.numpy as jnp
from jax.experimental import pallas as pl
from jax.experimental.pallas import tpu as pltpu


def _round_up(a: int, b: int) -> int:
    return ((a + b - 1) // b) * b


def _rmsnorm_kernel(x_ref, w_ref, o_ref, *, eps: float, h_true: int,
                    chunk_rows: int, n_chunks: int):
    # x_ref: (block_rows, H_pad) input tile (original dtype)
    # w_ref: (1, H_pad) weight in f32 (zero in pad lanes), broadcast over rows
    # o_ref: (block_rows, H_pad) output tile (same dtype as input)
    w = w_ref[...]                       # hoisted out of the chunk loop
    inv_h = 1.0 / float(h_true)          # mean over the *true* H (pad lanes are 0)

    def one_chunk(c):
        r0 = pl.multiple_of(c * chunk_rows, chunk_rows)
        x = x_ref[pl.ds(r0, chunk_rows), :].astype(jnp.float32)   # torch .float()
        ms = jnp.sum(x * x, axis=-1, keepdims=True) * inv_h        # mean(x^2)
        inv = jax.lax.rsqrt(ms + eps)                              # rsqrt(ms+eps)
        o_ref[pl.ds(r0, chunk_rows), :] = (x * inv * w).astype(o_ref.dtype)

    if n_chunks == 1:
        one_chunk(0)
    else:
        def body(c, carry):
            one_chunk(c)
            return carry
        # short, fixed trip count -> unroll for LLO scheduler visibility
        jax.lax.fori_loop(0, n_chunks, body, 0, unroll=True)


def _vmem_limit_bytes() -> int:
    """Per-generation scoped-VMEM limit derived from physical VMEM."""
    physical = 64 * 1024 * 1024          # v7x per-TC VMEM = worst case across gens
    try:
        physical = int(pltpu.get_tpu_info().vmem_capacity_bytes)
    except Exception:
        pass
    # v5e/v6e (128 MiB physical) -> 64 MiB limit; v7x (64 MiB) -> 48 MiB limit.
    return min(64 * 1024 * 1024, (physical * 3) // 4)


def _plan_tiles(rows: int, h_pad: int, itemsize: int, vmem_limit: int):
    """Pick (block_rows, chunk_rows, n_chunks) for the row tiling."""
    plan_budget = int(0.8 * vmem_limit)  # plan against ~0.8x of the granted limit

    # In-kernel chunk size bounds the live f32 temporaries (independent of
    # block_rows). 256 rows is a good default; shrink for very wide H.
    chunk_rows = 256
    while chunk_rows > 32 and chunk_rows * h_pad * 16 > plan_budget // 4:
        chunk_rows //= 2
    f32_temp_bytes = chunk_rows * h_pad * 4 * 4     # ~4 live f32 chunk copies

    # Double-buffered input + output HBM<->VMEM tiles.
    per_row_bytes = h_pad * itemsize * 4
    max_rows = (plan_budget - f32_temp_bytes) // per_row_bytes
    max_rows = max(32, (max_rows // 32) * 32)

    # Guarantee >= 2 grid steps whenever there is enough work, so the
    # ("parallel",) grid axis actually uses both v7x TensorCores.
    if rows >= 64:
        two_core_cap = _round_up(-(-rows // 2), 32)
    else:
        two_core_cap = _round_up(max(rows, 1), 32)

    block_rows = max(32, min(max_rows, two_core_cap, 4096))
    if block_rows >= chunk_rows:
        block_rows = (block_rows // chunk_rows) * chunk_rows
    else:
        chunk_rows = block_rows          # single in-kernel chunk
    n_chunks = block_rows // chunk_rows
    return block_rows, chunk_rows, n_chunks


def rms_norm_pallas(x: jax.Array, weight: jax.Array, eps: float = 1e-5) -> jax.Array:
    """RMSNorm over the last axis of x. x: (..., H), weight: (H,)."""
    orig_shape = x.shape
    H = orig_shape[-1]
    rows = math.prod(orig_shape[:-1]) if len(orig_shape) > 1 else 1

    x2d = x.reshape(rows, H)
    w2d = weight.astype(jnp.float32).reshape(1, H)

    # Lane-dense guard: keep the normalized axis a multiple of 128 so every
    # store is an unmasked vst. Pad lanes are zero -> sum of squares unchanged,
    # and the kernel divides by the true H.
    H_pad = _round_up(H, 128)
    if H_pad != H:
        x2d = jnp.pad(x2d, ((0, 0), (0, H_pad - H)))
        w2d = jnp.pad(w2d, ((0, 0), (0, H_pad - H)))

    itemsize = jnp.dtype(x.dtype).itemsize
    vmem_limit = _vmem_limit_bytes()
    block_rows, chunk_rows, n_chunks = _plan_tiles(rows, H_pad, itemsize, vmem_limit)

    grid = (pl.cdiv(rows, block_rows),)  # ragged last block handled by Pallas

    out = pl.pallas_call(
        functools.partial(_rmsnorm_kernel, eps=eps, h_true=H,
                          chunk_rows=chunk_rows, n_chunks=n_chunks),
        out_shape=jax.ShapeDtypeStruct((rows, H_pad), x.dtype),
        grid_spec=pltpu.PrefetchScalarGridSpec(
            num_scalar_prefetch=0,
            grid=grid,
            in_specs=[
                pl.BlockSpec((block_rows, H_pad), lambda i: (i, 0)),
                pl.BlockSpec((1, H_pad), lambda i: (0, 0)),
            ],
            out_specs=pl.BlockSpec((block_rows, H_pad), lambda i: (i, 0)),
        ),
        compiler_params=pltpu.CompilerParams(
            dimension_semantics=("parallel",),     # megacore sharding on v7x
            vmem_limit_bytes=vmem_limit,           # 64 MiB v5e/v6e, 48 MiB v7x
        ),
    )(x2d, w2d)

    if H_pad != H:
        out = out[:, :H]
    return out.reshape(orig_shape)


class RMSNormPallas:
    """Mirror of the torch RMSNorm module (weight=True branch)."""

    def __init__(self, normalized_shape: int, eps: float = 1e-5):
        self.eps = eps
        # torch.nn.Parameter(torch.ones(normalized_shape)) — deterministic init
        self.weight = jnp.ones((normalized_shape,), dtype=jnp.float32)

    def __call__(self, x: jax.Array) -> jax.Array:
        return rms_norm_pallas(x, self.weight, self.eps)


def _reference(x, weight, eps=1e-5):
    xf = x.astype(jnp.float32)
    out = xf * jax.lax.rsqrt(jnp.mean(xf * xf, axis=-1, keepdims=True) + eps)
    return (out * weight).astype(x.dtype)


if __name__ == "__main__":
    key = jax.random.PRNGKey(0)
    tests = [
        ((2, 8, 128), jnp.bfloat16),    # small: H = one lane tile, rows < block
        ((2, 77, 768), jnp.bfloat16),   # d_model=768, ragged last block, grid >= 2
        ((2, 9, 80), jnp.float32),      # feat_in=80: exercises the H%128 pad path
    ]
    for shape, dtype in tests:
        key, sub = jax.random.split(key)
        x = jax.random.normal(sub, shape, dtype=jnp.float32).astype(dtype)
        H = shape[-1]
        # non-trivial (still deterministic) weight to exercise broadcasting
        weight = 1.0 + 0.01 * jnp.arange(H, dtype=jnp.float32)

        y = jax.block_until_ready(rms_norm_pallas(x, weight, eps=1e-5))
        y_ref = _reference(x, weight, 1e-5)

        assert y.shape == x.shape and y.dtype == x.dtype
        tol = 2e-2 if dtype == jnp.bfloat16 else 1e-5
        assert jnp.allclose(y.astype(jnp.float32), y_ref.astype(jnp.float32),
                            atol=tol, rtol=tol), f"mismatch at shape={shape}"

    print("KERNEL_OK")
</pallas_src>

<mosaic_0001>
module attributes {stable_mosaic.version = 11 : i64} {
  func.func @_rmsnorm_kernel(%arg0: i32, %arg1: memref<32x128xbf16, #tpu.memory_space<vmem>>, %arg2: memref<1x128xf32, #tpu.memory_space<vmem>>, %arg3: memref<32x128xbf16, #tpu.memory_space<vmem>>) attributes {dimension_semantics = [#tpu.dimension_semantics<parallel>], iteration_bounds = array<i64: 1>, scalar_prefetch = 0 : i64, scratch_operands = 0 : i64, tpu.core_type = #tpu.core_type<tc>, window_params = [{transform_indices = @transform_0, window_bounds = array<i64: 32, 128>}, {pipeline_mode = #tpu.pipeline_mode<synchronous>, transform_indices = @transform_1, window_bounds = array<i64: 1, 128>}, {transform_indices = @transform_2, window_bounds = array<i64: 32, 128>}]} {
    %c0 = arith.constant 0 : index
    %c0_0 = arith.constant 0 : index
    %0 = vector.load %arg2[%c0, %c0_0] : memref<1x128xf32, #tpu.memory_space<vmem>>, vector<1x128xf32>
    %c0_i32 = arith.constant 0 : i32
    %1 = tpu.assume_multiple %c0_i32, 32 : i32
    %2 = arith.index_cast %1 : i32 to index
    %c0_1 = arith.constant 0 : index
    %3 = vector.load %arg1[%2, %c0_1] : memref<32x128xbf16, #tpu.memory_space<vmem>>, vector<32x128xbf16>
    %4 = arith.extf %3 : vector<32x128xbf16> to vector<32x128xf32>
    %5 = arith.mulf %4, %4 : vector<32x128xf32>
    %cst = arith.constant dense<0.000000e+00> : vector<32xf32>
    %6 = vector.multi_reduction <add>, %5, %cst [1] : vector<32x128xf32> to vector<32xf32>
    %7 = vector.shape_cast %6 : vector<32xf32> to vector<32x1xf32>
    %cst_2 = arith.constant 7.812500e-03 : f32
    %8 = vector.broadcast %cst_2 : f32 to vector<32x1xf32>
    %9 = arith.mulf %7, %8 : vector<32x1xf32>
    %cst_3 = arith.constant 9.99999974E-6 : f32
    %10 = vector.broadcast %cst_3 : f32 to vector<32x1xf32>
    %11 = arith.addf %9, %10 : vector<32x1xf32>
    %12 = math.rsqrt %11 : vector<32x1xf32>
    %13 = vector.broadcast %12 : vector<32x1xf32> to vector<32x128xf32>
    %14 = arith.mulf %4, %13 : vector<32x128xf32>
    %15 = vector.broadcast %0 : vector<1x128xf32> to vector<32x128xf32>
    %16 = arith.mulf %14, %15 : vector<32x128xf32>
    %17 = arith.truncf %16 : vector<32x128xf32> to vector<32x128xbf16>
    %18 = arith.index_cast %1 : i32 to index
    %c0_4 = arith.constant 0 : index
    %19 = vector.load %arg3[%18, %c0_4] : memref<32x128xbf16, #tpu.memory_space<vmem>>, vector<32x128xbf16>
    tpu.vector_store %arg3[%18, %c0_4], %17 {strides = array<i32>} : memref<32x128xbf16, #tpu.memory_space<vmem>>, vector<32x128xbf16>,
    return
  }
  func.func @transform_0(%arg0: i32) -> (i32, i32) {
    %c0_i32 = arith.constant 0 : i32
    %c0_i32_0 = arith.constant 0 : i32
    return %arg0, %c0_i32 : i32, i32
  }
  func.func @transform_1(%arg0: i32) -> (i32, i32) {
    %c0_i32 = arith.constant 0 : i32
    %c0_i32_0 = arith.constant 0 : i32
    %c0_i32_1 = arith.constant 0 : i32
    return %c0_i32, %c0_i32_0 : i32, i32
  }
  func.func @transform_2(%arg0: i32) -> (i32, i32) {
    %c0_i32 = arith.constant 0 : i32
    %c0_i32_0 = arith.constant 0 : i32
    return %arg0, %c0_i32 : i32, i32
  }
}

</mosaic_0001>

<llo_original>
// kernel: tpu_custom_call.1
$region0: #{tpu_custom_call.1}
  #allocation0 [shape = 'u32[]', space=smem, size = 0x4, offset = 0x4, fixed_abs, tag = 'smem constant byte address 0x4 - core index']
  #allocation1 [shape = 'u32[72,128]{1,0:T(1,128)}', space=vmem, size = 0x9000, scoped, tag = 'internal scratch']
  %s0 = inlined_call_operand.hbm [shape: bf16[16,128], index: 0, kind: input, shape index: {}]
  %s1 = inlined_call_operand.hbm [shape: f32[1,128], index: 1, kind: input, shape index: {}]
  %s2 = inlined_call_operand.hbm [shape: bf16[16,128], index: 2, kind: output, shape index: {}]
  %s3 = sld [smem:[#allocation0]]
  $region26: #{tpu_custom_call.1} parent=0
    _
  %s5 = ssub.s32 1, %s3
  %s6 = scalar_select 0, %s5, %s3
  $region1: #{tpu_custom_call.1} parent=0
    #allocation2 [shape = 'u8[8192]{0}', space=vmem, size = 0x2000, scoped, tag = 'input window, operand 0, single buffered']
    #allocation3 [shape = 's32[1]{0}', space=sflag, size = 0x4, scoped, tag = 'scoped memory for tpu_custom_call.1']
    #allocation4 [shape = 's32[1]{0}', space=sflag, size = 0x4, scoped, tag = 'scoped memory for tpu_custom_call.1']
    #allocation5 [shape = 'u8[512]{0}', space=vmem, size = 0x400, scoped, tag = 'input window, operand 1, single buffered']
    #allocation6 [shape = 's32[1]{0}', space=sflag, size = 0x4, scoped, tag = 'scoped memory for tpu_custom_call.1']
    #allocation7 [shape = 'u8[8192]{0}', space=vmem, size = 0x2000, scoped, tag = 'output window, operand 0, single buffered']
    %7 = vsyncpa [#allocation3], 0
    %8 = vsyncpa [#allocation6], 0
    %9 = vsyncpa [#allocation4], 0
    // Predicated region
    $region2: #{tpu_custom_call.1} parent=1 // pred_check
      _
    $region3: #{tpu_custom_call.1} parent=1 // pred_check_branch
      %11 = sbr.rel (0) target = $region5
    $region4: #{tpu_custom_call.1} parent=1 // pred_region
      %13 = vsyncadd [#allocation3], 128
      %s14 = sshll.u32 %s0, 4
      %s15 = int_to_ptr.hbm [resolvable:$true] %s14
      %s16 = sshll.u32 [#allocation2], 4
      %s17 = int_to_ptr.vmem [resolvable:$true] %s16
      %22 = dma.hbm_to_vmem [thread:$0]  %s15, 128, %s17, [#allocation3], 64, 64, 4
    $region5: #{tpu_custom_call.1} parent=1 // pred_fallthru
      _
    // Predicated region
    $region6: #{tpu_custom_call.1} parent=1 // pred_check
      _
    $region7: #{tpu_custom_call.1} parent=1 // pred_check_branch
      %24 = sbr.rel (0) target = $region9
    $region8: #{tpu_custom_call.1} parent=1 // pred_region
      %26 = vsyncadd [#allocation6], 0
      %s28 = sshll.u32 %s1, 4
      %s29 = int_to_ptr.hbm [resolvable:$true] %s28
      %s30 = sshll.u32 [#allocation5], 4
      %s31 = int_to_ptr.vmem [resolvable:$true] %s30
      %33 = dma.hbm_to_vmem [thread:$0]  %s29, 16, %s31, [#allocation6]
    $region9: #{tpu_custom_call.1} parent=1 // pred_fallthru
      _
    // Predicated region
    $region10: #{tpu_custom_call.1} parent=1 // pred_check
      _
    $region11: #{tpu_custom_call.1} parent=1 // pred_check_branch
      %35 = sbr.rel (0) target = $region13
    $region12: #{tpu_custom_call.1} parent=1 // pred_region
      %37 = dma.done [#allocation3], 256
    $region13: #{tpu_custom_call.1} parent=1 // pred_fallthru
      _
    // Predicated region
    $region14: #{tpu_custom_call.1} parent=1 // pred_check
      _
    $region15: #{tpu_custom_call.1} parent=1 // pred_check_branch
      %39 = sbr.rel (0) target = $region17
    $region16: #{tpu_custom_call.1} parent=1 // pred_region
      %41 = dma.done [#allocation6], 16
    $region17: #{tpu_custom_call.1} parent=1 // pred_fallthru
      _
    %v42 = vld [vmem:[#allocation5] sm:$0x1]
    %v43 = vld [vmem:[#allocation2] sm:$0xf]
    %v44 = vld [vmem:[#allocation2 + $0x4] sm:$0xf]
    %v45 = vld [vmem:[#allocation2 + $0x8] sm:$0xf]
    %v46 = vld [vmem:[#allocation2 + $0xc] sm:$0xf]
    %v47 = vunpack.c.l.bf16 %v43
    %v48 = vunpack.c.l.bf16 %v44
    %v49 = vunpack.c.l.bf16 %v45
    %v50 = vunpack.c.l.bf16 %v46
    %v51 = vmul.f32 %v47, %v47
    %v52 = vmul.f32 %v48, %v48
    %v53 = vmul.f32 %v49, %v49
    %v54 = vmul.f32 %v50, %v50
    %55 = vadd.xlane.f32.xlu0 %v51
    %v56 = vpop.xlane.xlu0 %55
    %57 = vadd.xlane.f32.xlu0 %v52
    %v58 = vpop.xlane.xlu0 %57
    %59 = vadd.xlane.f32.xlu0 %v53
    %v60 = vpop.xlane.xlu0 %59
    %61 = vadd.xlane.f32.xlu0 %v54
    %v62 = vpop.xlane.xlu0 %61
    %v63 = vmul.f32 %v56, 0.0078125
    %v64 = vmul.f32 %v58, 0.0078125
    %v65 = vmul.f32 %v60, 0.0078125
    %v66 = vmul.f32 %v62, 0.0078125
    %v67 = vadd.f32 %v63, 1e-05
    %v68 = vadd.f32 %v64, 1e-05
    %v69 = vadd.f32 %v65, 1e-05
    %v70 = vadd.f32 %v66, 1e-05
    %v71 = vrsqrt.pop %v67
    %v72 = vmul.f32 %v71, %v67
    %v73 = vmul.f32 %v72, %v71
    %v74 = vmul.f32 0.5, %v73
    %v75 = vsub.f32 1.5, %v74
    %v76 = vmul.f32 %v71, %v75
    %vm77 = vweird.f32 %v67
    %vm78 = vweird.f32 %v71
    %vm79 = vmor %vm77, %vm78
    %v80 = vsel %vm79, %v71, %v76
    %v81 = vrsqrt.pop %v68
    %v82 = vmul.f32 %v81, %v68
    %v83 = vmul.f32 %v82, %v81
    %v84 = vmul.f32 0.5, %v83
    %v85 = vsub.f32 1.5, %v84
    %v86 = vmul.f32 %v81, %v85
    %vm87 = vweird.f32 %v68
    %vm88 = vweird.f32 %v81
    %vm89 = vmor %vm87, %vm88
    %v90 = vsel %vm89, %v81, %v86
    %v91 = vrsqrt.pop %v69
    %v92 = vmul.f32 %v91, %v69
    %v93 = vmul.f32 %v92, %v91
    %v94 = vmul.f32 0.5, %v93
    %v95 = vsub.f32 1.5, %v94
    %v96 = vmul.f32 %v91, %v95
    %vm97 = vweird.f32 %v69
    %vm98 = vweird.f32 %v91
    %vm99 = vmor %vm97, %vm98
    %v100 = vsel %vm99, %v91, %v96
    %v101 = vrsqrt.pop %v70
    %v102 = vmul.f32 %v101, %v70
    %v103 = vmul.f32 %v102, %v101
    %v104 = vmul.f32 0.5, %v103
    %v105 = vsub.f32 1.5, %v104
    %v106 = vmul.f32 %v101, %v105
    %vm107 = vweird.f32 %v70
    %vm108 = vweird.f32 %v101
    %vm109 = vmor %vm107, %vm108
    %v110 = vsel %vm109, %v101, %v106
    %v111 = vmul.f32 %v47, %v80
    %v112 = vmul.f32 %v48, %v90
    %v113 = vmul.f32 %v49, %v100
    %v114 = vmul.f32 %v50, %v110
    %v116 = vperm.slane %v42, 0
    %v118 = vmul.f32 %v111, %v116
    %v119 = vmul.f32 %v112, %v116
    %v120 = vmul.f32 %v113, %v116
    %v121 = vmul.f32 %v114, %v116
    %v122 = vpack.c.bf16 %v118, %v118
    %v123 = vpack.c.bf16 %v119, %v119
    %v124 = vpack.c.bf16 %v120, %v120
    %v125 = vpack.c.bf16 %v121, %v121
    %126 = vst [vmem:[#allocation7] sm:$0xf] %v122
    %127 = vst [vmem:[#allocation7 + $0x4] sm:$0xf] %v123
    %128 = vst [vmem:[#allocation7 + $0x8] sm:$0xf] %v124
    %129 = vst [vmem:[#allocation7 + $0xc] sm:$0xf] %v125
    // Predicated region
    $region18: #{tpu_custom_call.1} parent=1 // pred_check
      _
    $region19: #{tpu_custom_call.1} parent=1 // pred_check_branch
      %131 = sbr.rel (0) target = $region21
    $region20: #{tpu_custom_call.1} parent=1 // pred_region
      %133 = vsyncadd [#allocation4], 128
      %s134 = sshll.u32 [#allocation7], 4
      %s135 = int_to_ptr.vmem [resolvable:$true] %s134
      %s136 = sshll.u32 %s2, 4
      %s137 = int_to_ptr.hbm [resolvable:$true] %s136
      %142 = dma.vmem_to_hbm [thread:$0]  %s135, 128, %s137, [#allocation4], 64, 64, 4
    $region21: #{tpu_custom_call.1} parent=1 // pred_fallthru
      _
    // Predicated region
    $region22: #{tpu_custom_call.1} parent=1 // pred_check
      _
    $region23: #{tpu_custom_call.1} parent=1 // pred_check_branch
      %144 = sbr.rel (0) target = $region25
    $region24: #{tpu_custom_call.1} parent=1 // pred_region
      %146 = dma.done [#allocation4], 256
    $region25: #{tpu_custom_call.1} parent=1 // pred_fallthru
      _
    %147 = vsyncpa [#allocation3], 1
    %148 = vsyncpa [#allocation6], 1
    %149 = vsyncpa [#allocation4], 1

</llo_original>
